<compile_context>
chip_gen: v6e
topology: v6e:2x2x1
jax: 0.10.0
libtpu: 0.0.40
codegen_flags: <defaults>
</compile_context>

<pallas_src>
import math

import jax
import jax.numpy as jnp
from jax.experimental import pallas as pl
from jax.experimental.pallas import tpu as pltpu

_MAX_TM = 512                      # max rows per grid step
_VMEM_BUDGET = 40 * 1024 * 1024    # target resident VMEM footprint (all gens)


def _round_up(x, m):
    return ((x + m - 1) // m) * m


# ----------------------------- Pallas kernel -----------------------------

def _contrast_kernel(xa_ref, xb_ref, w1_ref, b1_ref, w2_ref, b2_ref,
                     oa_ref, ob_ref):
    """Fused shared-weight 2-layer MLP on both branches + symmetric residual."""
    tm = xa_ref.shape[0]
    xa = xa_ref[...]                        # (TM, F) input dtype
    xb = xb_ref[...]
    w1 = w1_ref[...]                        # (F, F) MXU dtype (bf16)
    w2 = w2_ref[...]
    b1 = b1_ref[...].astype(jnp.float32)    # (1, F)
    b2 = b2_ref[...].astype(jnp.float32)

    # Stack both branches into one LHS -> one MXU pass per Linear layer.
    x = jnp.concatenate([xa, xb], axis=0).astype(w1.dtype)          # (2*TM, F)
    h = jnp.dot(x, w1, preferred_element_type=jnp.float32) + b1
    h = jnp.maximum(h, 0.0)                                          # ReLU
    y = jnp.dot(h.astype(w2.dtype), w2,
                preferred_element_type=jnp.float32) + b2             # (2*TM, F)
    y_a = y[:tm]                             # model(x_a)
    y_b = y[tm:]                             # model(x_b)

    # Symmetric contrast (cross-branch residual), computed in f32.
    oa_ref[...] = (xa.astype(jnp.float32) - y_b).astype(oa_ref.dtype)
    ob_ref[...] = (xb.astype(jnp.float32) - y_a).astype(ob_ref.dtype)


# ----------------------------- Wrapper -----------------------------

def symmetric_contrast_block(x_a, x_b, w1, b1, w2, b2,
                             *, mxu_dtype=jnp.bfloat16):
    """PyTorch Linear semantics (y = x @ W.T + b).  Returns
    (x_a - model(x_b), x_b - model(x_a)).  Leading dims are arbitrary,
    the last dim is num_features."""
    orig_shape = x_a.shape
    feat = orig_shape[-1]
    rows = math.prod(orig_shape[:-1]) if len(orig_shape) > 1 else 1

    in_dtype = x_a.dtype
    out_dtype = in_dtype
    # Free (no-copy) reshapes; no padding, no extra HBM round trip.
    xa2 = x_a.reshape(rows, feat)
    xb2 = x_b.reshape(rows, feat)

    # ---- Row tiling -------------------------------------------------------
    if rows > _MAX_TM:
        tm = _MAX_TM
    else:
        # >= 2 grid steps whenever possible so both v7x TensorCores get work.
        tm = max(8, _round_up(-(-rows // 2), 8))

    in_b = jnp.dtype(in_dtype).itemsize
    out_b = jnp.dtype(out_dtype).itemsize
    wgt_b = jnp.dtype(mxu_dtype).itemsize

    def footprint(tm_):
        io = 2 * 2 * tm_ * feat * (in_b + out_b)        # double-buffered in/out
        wgt = 2 * feat * feat * wgt_b + 2 * feat * 4    # single-buffered W + b
        tmp = 2 * tm_ * feat * 16                       # stacked LHS + f32 h/y
        return io + wgt + tmp

    while tm > 8 and footprint(tm) > _VMEM_BUDGET:
        tm = max(8, _round_up(tm // 2, 8))

    grid = (pl.cdiv(rows, tm),)
    vmem_limit = int(min(max(1.5 * footprint(tm) + (4 << 20), 16 << 20),
                         60 << 20))

    # TODO(synk): for very large num_features (F >= ~4096: the bf16 (F,F)
    # weights alone exceed ~32 MiB) the whole-weight-resident design does not
    # fit v7x's 64 MiB VMEM; it needs an inner weight pipeline
    # (pltpu.emit_pipeline / an extra "arbitrary" grid axis with accumulator).

    # PyTorch Linear stores W as (out, in); the matmul matrix is W.T (in, out).
    # NOTE: when weights are reused across many calls, hoist this transpose +
    # bf16 cast out of the per-call path (pass pre-transposed bf16 weights).
    w1_m = jnp.asarray(w1, jnp.float32).T.astype(mxu_dtype)
    w2_m = jnp.asarray(w2, jnp.float32).T.astype(mxu_dtype)
    b1_m = jnp.asarray(b1, jnp.float32).reshape(1, feat)
    b2_m = jnp.asarray(b2, jnp.float32).reshape(1, feat)

    row_spec = pl.BlockSpec((tm, feat), lambda i: (i, 0))
    # Constant index_map -> loaded once; single-buffered (no VMEM waste).
    wgt_spec = pl.BlockSpec((feat, feat), lambda i: (0, 0),
                            pipeline_mode=pl.Buffered(1))
    bias_spec = pl.BlockSpec((1, feat), lambda i: (0, 0),
                             pipeline_mode=pl.Buffered(1))

    cost = pl.CostEstimate(
        flops=8 * rows * feat * feat,          # 2 branches x 2 layers x 2MF^2
        transcendentals=0,
        bytes_accessed=(2 * rows * feat * (in_b + out_b)
                        + 2 * feat * feat * wgt_b + 2 * feat * 4),
    )

    out_a, out_b_ = pl.pallas_call(
        _contrast_kernel,
        out_shape=(jax.ShapeDtypeStruct((rows, feat), out_dtype),
                   jax.ShapeDtypeStruct((rows, feat), out_dtype)),
        grid_spec=pltpu.PrefetchScalarGridSpec(
            num_scalar_prefetch=0,
            grid=grid,
            in_specs=[row_spec, row_spec, wgt_spec, bias_spec,
                      wgt_spec, bias_spec],
            out_specs=[row_spec, row_spec],
        ),
        compiler_params=pltpu.CompilerParams(
            dimension_semantics=("parallel",),
            vmem_limit_bytes=vmem_limit,
        ),
        cost_estimate=cost,
    )(xa2, xb2, w1_m, b1_m, w2_m, b2_m)

    return out_a.reshape(orig_shape), out_b_.reshape(orig_shape)


# ----------------------------- Reference -----------------------------

def _reference(x_a, x_b, w1, b1, w2, b2):
    def mlp(x):
        h = jnp.maximum(x @ w1.T + b1, 0.0)
        return h @ w2.T + b2
    return x_a - mlp(x_b), x_b - mlp(x_a)


# ----------------------------- Demo -----------------------------

if __name__ == "__main__":
    key = jax.random.PRNGKey(0)
    k_w1, k_b1, k_w2, k_b2, k_a, k_b, k_a2, k_b2x = jax.random.split(key, 8)

    batch, seq, feat = 2, 8, 32
    bound = 1.0 / math.sqrt(feat)
    w1 = jax.random.uniform(k_w1, (feat, feat), jnp.float32, -bound, bound)
    b1 = jax.random.uniform(k_b1, (feat,), jnp.float32, -bound, bound)
    w2 = jax.random.uniform(k_w2, (feat, feat), jnp.float32, -bound, bound)
    b2 = jax.random.uniform(k_b2, (feat,), jnp.float32, -bound, bound)

    x_a = jax.random.normal(k_a, (batch, seq, feat), dtype=jnp.float32)
    x_b = jax.random.normal(k_b, (batch, seq, feat), dtype=jnp.float32)

    fwd = jax.jit(symmetric_contrast_block)

    # Case 1: small input -> 2-step parallel grid (tm=8), no padding anywhere.
    out_a, out_b = jax.block_until_ready(fwd(x_a, x_b, w1, b1, w2, b2))
    assert out_a.shape == x_a.shape and out_b.shape == x_b.shape
    ref_a, ref_b = _reference(x_a, x_b, w1, b1, w2, b2)
    err = max(float(jnp.max(jnp.abs(out_a - ref_a))),
              float(jnp.max(jnp.abs(out_b - ref_b))))
    assert err < 1e-1, f"case1 max abs err {err}"

    # Case 2: rows=1200 -> tm=512, grid=3 with a masked boundary block.
    x_a2 = jax.random.normal(k_a2, (4, 300, feat), dtype=jnp.float32)
    x_b2 = jax.random.normal(k_b2x, (4, 300, feat), dtype=jnp.float32)
    out_a2, out_b2 = jax.block_until_ready(fwd(x_a2, x_b2, w1, b1, w2, b2))
    ref_a2, ref_b2 = _reference(x_a2, x_b2, w1, b1, w2, b2)
    err2 = max(float(jnp.max(jnp.abs(out_a2 - ref_a2))),
               float(jnp.max(jnp.abs(out_b2 - ref_b2))))
    assert err2 < 1e-1, f"case2 max abs err {err2}"

    print("KERNEL_OK")
</pallas_src>

<mosaic_0001>
module attributes {stable_mosaic.version = 11 : i64} {
  func.func @_contrast_kernel(%arg0: i32, %arg1: memref<8x32xf32, #tpu.memory_space<vmem>>, %arg2: memref<8x32xf32, #tpu.memory_space<vmem>>, %arg3: memref<32x32xbf16, #tpu.memory_space<vmem>>, %arg4: memref<1x32xf32, #tpu.memory_space<vmem>>, %arg5: memref<32x32xbf16, #tpu.memory_space<vmem>>, %arg6: memref<1x32xf32, #tpu.memory_space<vmem>>, %arg7: memref<8x32xf32, #tpu.memory_space<vmem>>, %arg8: memref<8x32xf32, #tpu.memory_space<vmem>>) attributes {dimension_semantics = [#tpu.dimension_semantics<parallel>], iteration_bounds = array<i64: 2>, scalar_prefetch = 0 : i64, scratch_operands = 0 : i64, tpu.core_type = #tpu.core_type<tc>, window_params = [{transform_indices = @transform_0, window_bounds = array<i64: 8, 32>}, {transform_indices = @transform_1, window_bounds = array<i64: 8, 32>}, {pipeline_mode = #tpu.pipeline_mode<synchronous>, transform_indices = @transform_2, window_bounds = array<i64: 32, 32>}, {pipeline_mode = #tpu.pipeline_mode<synchronous>, transform_indices = @transform_3, window_bounds = array<i64: 1, 32>}, {pipeline_mode = #tpu.pipeline_mode<synchronous>, transform_indices = @transform_4, window_bounds = array<i64: 32, 32>}, {pipeline_mode = #tpu.pipeline_mode<synchronous>, transform_indices = @transform_5, window_bounds = array<i64: 1, 32>}, {transform_indices = @transform_6, window_bounds = array<i64: 8, 32>}, {transform_indices = @transform_7, window_bounds = array<i64: 8, 32>}]} {
    %c0 = arith.constant 0 : index
    %c0_0 = arith.constant 0 : index
    %0 = vector.load %arg1[%c0, %c0_0] : memref<8x32xf32, #tpu.memory_space<vmem>>, vector<8x32xf32>
    %c0_1 = arith.constant 0 : index
    %c0_2 = arith.constant 0 : index
    %1 = vector.load %arg2[%c0_1, %c0_2] : memref<8x32xf32, #tpu.memory_space<vmem>>, vector<8x32xf32>
    %c0_3 = arith.constant 0 : index
    %c0_4 = arith.constant 0 : index
    %2 = vector.load %arg3[%c0_3, %c0_4] : memref<32x32xbf16, #tpu.memory_space<vmem>>, vector<32x32xbf16>
    %c0_5 = arith.constant 0 : index
    %c0_6 = arith.constant 0 : index
    %3 = vector.load %arg5[%c0_5, %c0_6] : memref<32x32xbf16, #tpu.memory_space<vmem>>, vector<32x32xbf16>
    %c0_7 = arith.constant 0 : index
    %c0_8 = arith.constant 0 : index
    %4 = vector.load %arg4[%c0_7, %c0_8] : memref<1x32xf32, #tpu.memory_space<vmem>>, vector<1x32xf32>
    %c0_9 = arith.constant 0 : index
    %c0_10 = arith.constant 0 : index
    %5 = vector.load %arg6[%c0_9, %c0_10] : memref<1x32xf32, #tpu.memory_space<vmem>>, vector<1x32xf32>
    %6 = tpu.concatenate %0, %1 in 0 : vector<8x32xf32>, vector<8x32xf32> -> vector<16x32xf32>
    %7 = arith.truncf %6 : vector<16x32xf32> to vector<16x32xbf16>
    %cst = arith.constant dense<0.000000e+00> : vector<16x32xf32>
    %8 = tpu.matmul %7, %2, %cst {dimension_numbers = #tpu.dot_dimension_numbers<[1], [0], [0], [1], [0, 0, 1, 1], [], []>} : vector<16x32xbf16>, vector<32x32xbf16>, vector<16x32xf32> -> vector<16x32xf32>
    %9 = vector.broadcast %4 : vector<1x32xf32> to vector<16x32xf32>
    %10 = arith.addf %8, %9 : vector<16x32xf32>
    %cst_11 = arith.constant 0.000000e+00 : f32
    %11 = vector.broadcast %cst_11 : f32 to vector<16x32xf32>
    %12 = arith.maximumf %10, %11 : vector<16x32xf32>
    %13 = arith.truncf %12 : vector<16x32xf32> to vector<16x32xbf16>
    %cst_12 = arith.constant dense<0.000000e+00> : vector<16x32xf32>
    %14 = tpu.matmul %13, %3, %cst_12 {dimension_numbers = #tpu.dot_dimension_numbers<[1], [0], [0], [1], [0, 0, 1, 1], [], []>} : vector<16x32xbf16>, vector<32x32xbf16>, vector<16x32xf32> -> vector<16x32xf32>
    %15 = vector.broadcast %5 : vector<1x32xf32> to vector<16x32xf32>
    %16 = arith.addf %14, %15 : vector<16x32xf32>
    %17 = vector.extract_strided_slice %16 {offsets = [0, 0], sizes = [8, 32], strides = [1, 1]} : vector<16x32xf32> to vector<8x32xf32>
    %18 = vector.extract_strided_slice %16 {offsets = [8, 0], sizes = [8, 32], strides = [1, 1]} : vector<16x32xf32> to vector<8x32xf32>
    %19 = arith.subf %0, %18 : vector<8x32xf32>
    %c0_13 = arith.constant 0 : index
    %c0_14 = arith.constant 0 : index
    %20 = vector.load %arg7[%c0_13, %c0_14] : memref<8x32xf32, #tpu.memory_space<vmem>>, vector<8x32xf32>
    tpu.vector_store %arg7[%c0_13, %c0_14], %19 {strides = array<i32>} : memref<8x32xf32, #tpu.memory_space<vmem>>, vector<8x32xf32>,
    %21 = arith.subf %1, %17 : vector<8x32xf32>
    %c0_15 = arith.constant 0 : index
    %c0_16 = arith.constant 0 : index
    %22 = vector.load %arg8[%c0_15, %c0_16] : memref<8x32xf32, #tpu.memory_space<vmem>>, vector<8x32xf32>
    tpu.vector_store %arg8[%c0_15, %c0_16], %21 {strides = array<i32>} : memref<8x32xf32, #tpu.memory_space<vmem>>, vector<8x32xf32>,
    return
  }
  func.func @transform_0(%arg0: i32) -> (i32, i32) {
    %c0_i32 = arith.constant 0 : i32
    %c0_i32_0 = arith.constant 0 : i32
    return %arg0, %c0_i32 : i32, i32
  }
  func.func @transform_1(%arg0: i32) -> (i32, i32) {
    %c0_i32 = arith.constant 0 : i32
    %c0_i32_0 = arith.constant 0 : i32
    return %arg0, %c0_i32 : i32, i32
  }
  func.func @transform_2(%arg0: i32) -> (i32, i32) {
    %c0_i32 = arith.constant 0 : i32
    %c0_i32_0 = arith.constant 0 : i32
    %c0_i32_1 = arith.constant 0 : i32
    return %c0_i32, %c0_i32_0 : i32, i32
  }
  func.func @transform_3(%arg0: i32) -> (i32, i32) {
    %c0_i32 = arith.constant 0 : i32
    %c0_i32_0 = arith.constant 0 : i32
    %c0_i32_1 = arith.constant 0 : i32
    return %c0_i32, %c0_i32_0 : i32, i32
  }
  func.func @transform_4(%arg0: i32) -> (i32, i32) {
    %c0_i32 = arith.constant 0 : i32
    %c0_i32_0 = arith.constant 0 : i32
    %c0_i32_1 = arith.constant 0 : i32
    return %c0_i32, %c0_i32_0 : i32, i32
  }
  func.func @transform_5(%arg0: i32) -> (i32, i32) {
    %c0_i32 = arith.constant 0 : i32
    %c0_i32_0 = arith.constant 0 : i32
    %c0_i32_1 = arith.constant 0 : i32
    return %c0_i32, %c0_i32_0 : i32, i32
  }
  func.func @transform_6(%arg0: i32) -> (i32, i32) {
    %c0_i32 = arith.constant 0 : i32
    %c0_i32_0 = arith.constant 0 : i32
    return %arg0, %c0_i32 : i32, i32
  }
  func.func @transform_7(%arg0: i32) -> (i32, i32) {
    %c0_i32 = arith.constant 0 : i32
    %c0_i32_0 = arith.constant 0 : i32
    return %arg0, %c0_i32 : i32, i32
  }
}

</mosaic_0001>

<llo_original>
// kernel: symmetric_contrast_block.1
$region0: #{symmetric_contrast_block.1}
  #allocation0 [shape = 'u32[]', space=smem, size = 0x4, offset = 0x4, fixed_abs, tag = 'smem constant byte address 0x4 - core index']
  #allocation1 [shape = 'u32[144,128]{1,0:T(1,128)}', space=vmem, size = 0x12000, scoped, tag = 'internal scratch']
  %s0 = inlined_call_operand.vmem [shape: f32[16,32], index: 0, kind: input, shape index: {}]
  %s1 = inlined_call_operand.vmem [shape: f32[16,32], index: 1, kind: input, shape index: {}]
  %s2 = inlined_call_operand.vmem [shape: bf16[32,32], index: 2, kind: input, shape index: {}]
  %s3 = inlined_call_operand.vmem [shape: f32[1,32], index: 3, kind: input, shape index: {}]
  %s4 = inlined_call_operand.vmem [shape: bf16[32,32], index: 4, kind: input, shape index: {}]
  %s5 = inlined_call_operand.vmem [shape: f32[1,32], index: 5, kind: input, shape index: {}]
  %s6 = inlined_call_operand.hbm [shape: f32[16,32], index: 6, kind: output, shape index: {0}]
  %s7 = inlined_call_operand.hbm [shape: f32[16,32], index: 7, kind: output, shape index: {1}]
  %8 = xla_tuple %s6, %s7
  %s9 = sld [smem:[#allocation0]]
  $region65: #{symmetric_contrast_block.1} parent=0
    _
  %s11 = ssub.s32 1, %s9
  %s12 = scalar_select 0, %s11, %s9
  $region1: #{symmetric_contrast_block.1} parent=0
    #allocation2 [shape = 'u8[8192]{0}', space=vmem, size = 0x2000, scoped, tag = 'output window, operand 0']
    #allocation3 [shape = 's32[2]{0}', space=sflag, size = 0x8, scoped, tag = 'scoped memory for symmetric_contrast_block.1']
    #allocation4 [shape = 'u8[8192]{0}', space=vmem, size = 0x2000, scoped, tag = 'output window, operand 1']
    #allocation5 [shape = 's32[2]{0}', space=sflag, size = 0x8, scoped, tag = 'scoped memory for symmetric_contrast_block.1']
    %13 = vsyncpa [#allocation3], 0
    %s14 = scalar_lea.sflag [#allocation3], 1
    %15 = vsyncpa %s14, 0
    %16 = vsyncpa [#allocation5], 0
    %s17 = scalar_lea.sflag [#allocation5], 1
    %18 = vsyncpa %s17, 0
    loop: start=0, step=1, limit=4
    $region2: #{symmetric_contrast_block.1} parent=1 // loop_pre_header
      _
    $region3: #{symmetric_contrast_block.1} parent=1 // loop_header
      %s20 = sphi 0, %s24
      %p21 = scmp.ge.s32.totalorder %s20, 4
      %s30 = sphi 0, %s32
      %s33 = sphi 0, %s30
      %s34 = sphi 0, %s33
      %s50 = sphi 0, %s34
      %s56 = sphi 0, %s58
      %s59 = sphi 0, %s56
      %s60 = sphi 0, %s59
      %s76 = sphi 0, %s60
      %s80 = sphi 0, %s80
      %s82 = sphi 0, %s80
      %s83 = sphi 0, %s82
      %s97 = sphi 0, %s83
      %s101 = sphi 0, %s101
      %s103 = sphi 0, %s101
      %s104 = sphi 0, %s103
      %s118 = sphi 0, %s104
      %s122 = sphi 0, %s122
      %s124 = sphi 0, %s122
      %s125 = sphi 0, %s124
      %s139 = sphi 0, %s125
      %s143 = sphi 0, %s143
      %s145 = sphi 0, %s143
      %s146 = sphi 0, %s145
      %s160 = sphi 0, %s146
      %s166 = sphi 0, %s168
      %s169 = sphi 0, %s166
      %s170 = sphi 0, %s169
      %s186 = sphi 0, %s170
      %s192 = sphi 0, %s194
      %s195 = sphi 0, %s192
      %s196 = sphi 0, %s195
      %s212 = sphi 0, %s196
    $region4: #{symmetric_contrast_block.1} parent=1 // loop_header_branch
      %23 = sbr.rel (%p21) target = $region8
    $region5: #{symmetric_contrast_block.1} parent=1 // loop_body
      %s25 = ssub.s32 %s20, 1
      %s26 = ssub.s32 %s20, 2
      %s27 = sadd.s32 %s20, 1
      %s28 = ssub.s32 %s20, %s27
      %p29 = scmp.eq.s32.totalorder %s28, 0
      %s31 = sadd.s32 %s30, 1
      %s32 = scalar_select %p29, %s30, %s31
      %p35 = pneg %p29
      %p36 = scmp.eq.s32.totalorder %s20, 1
      %p37 = por %p35, %p36
      %p38 = scmp.ne.s32.totalorder %s30, %s33
      %p39 = scmp.eq.s32.totalorder %s20, 0
      %p40 = por %p38, %p39
      %p41 = scmp.ne.s32.totalorder %s30, %s33
      %p42 = scmp.eq.s32.totalorder %s25, 1
      %p43 = por %p41, %p42
      %p44 = scmp.ne.s32.totalorder %s33, %s34
      %p45 = scmp.eq.s32.totalorder %s25, 0
      %p46 = por %p44, %p45
      %p47 = scmp.ne.s32.totalorder %s33, %s34
      %p48 = scmp.eq.s32.totalorder %s26, 1
      %p49 = por %p47, %p48
      %p51 = scmp.ne.s32.totalorder %s34, %s50
      %p52 = scmp.eq.s32.totalorder %s26, 0
      %p53 = por %p51, %p52
      %s54 = ssub.s32 %s20, %s27
      %p55 = scmp.eq.s32.totalorder %s54, 0
      %s57 = sadd.s32 %s56, 1
      %s58 = scalar_select %p55, %s56, %s57
      %p61 = pneg %p55
      %p62 = scmp.eq.s32.totalorder %s20, 1
      %p63 = por %p61, %p62
      %p64 = scmp.ne.s32.totalorder %s56, %s59
      %p65 = scmp.eq.s32.totalorder %s20, 0
      %p66 = por %p64, %p65
      %p67 = scmp.ne.s32.totalorder %s56, %s59
      %p68 = scmp.eq.s32.totalorder %s25, 1
      %p69 = por %p67, %p68
      %p70 = scmp.ne.s32.totalorder %s59, %s60
      %p71 = scmp.eq.s32.totalorder %s25, 0
      %p72 = por %p70, %p71
      %p73 = scmp.ne.s32.totalorder %s59, %s60
      %p74 = scmp.eq.s32.totalorder %s26, 1
      %p75 = por %p73, %p74
      %p77 = scmp.ne.s32.totalorder %s60, %s76
      %p78 = scmp.eq.s32.totalorder %s26, 0
      %p79 = por %p77, %p78
      %s81 = sadd.s32 %s80, 1
      %p84 = scmp.eq.s32.totalorder %s20, 1
      %p85 = scmp.ne.s32.totalorder %s80, %s82
      %p86 = scmp.eq.s32.totalorder %s20, 0
      %p87 = por %p85, %p86
      %p88 = scmp.ne.s32.totalorder %s80, %s82
      %p89 = scmp.eq.s32.totalorder %s25, 1
      %p90 = por %p88, %p89
      %p91 = scmp.ne.s32.totalorder %s82, %s83
      %p92 = scmp.eq.s32.totalorder %s25, 0
      %p93 = por %p91, %p92
      %p94 = scmp.ne.s32.totalorder %s82, %s83
      %p95 = scmp.eq.s32.totalorder %s26, 1
      %p96 = por %p94, %p95
      %p98 = scmp.ne.s32.totalorder %s83, %s97
      %p99 = scmp.eq.s32.totalorder %s26, 0
      %p100 = por %p98, %p99
      %s102 = sadd.s32 %s101, 1
      %p105 = scmp.eq.s32.totalorder %s20, 1
      %p106 = scmp.ne.s32.totalorder %s101, %s103
      %p107 = scmp.eq.s32.totalorder %s20, 0
      %p108 = por %p106, %p107
      %p109 = scmp.ne.s32.totalorder %s101, %s103
      %p110 = scmp.eq.s32.totalorder %s25, 1
      %p111 = por %p109, %p110
      %p112 = scmp.ne.s32.totalorder %s103, %s104
      %p113 = scmp.eq.s32.totalorder %s25, 0
      %p114 = por %p112, %p113
      %p115 = scmp.ne.s32.totalorder %s103, %s104
      %p116 = scmp.eq.s32.totalorder %s26, 1
      %p117 = por %p115, %p116
      %p119 = scmp.ne.s32.totalorder %s104, %s118
      %p120 = scmp.eq.s32.totalorder %s26, 0
      %p121 = por %p119, %p120
      %s123 = sadd.s32 %s122, 1
      %p126 = scmp.eq.s32.totalorder %s20, 1
      %p127 = scmp.ne.s32.totalorder %s122, %s124
      %p128 = scmp.eq.s32.totalorder %s20, 0
      %p129 = por %p127, %p128
      %p130 = scmp.ne.s32.totalorder %s122, %s124
      %p131 = scmp.eq.s32.totalorder %s25, 1
      %p132 = por %p130, %p131
      %p133 = scmp.ne.s32.totalorder %s124, %s125
      %p134 = scmp.eq.s32.totalorder %s25, 0
      %p135 = por %p133, %p134
      %p136 = scmp.ne.s32.totalorder %s124, %s125
      %p137 = scmp.eq.s32.totalorder %s26, 1
      %p138 = por %p136, %p137
      %p140 = scmp.ne.s32.totalorder %s125, %s139
      %p141 = scmp.eq.s32.totalorder %s26, 0
      %p142 = por %p140, %p141
      %s144 = sadd.s32 %s143, 1
      %p147 = scmp.eq.s32.totalorder %s20, 1
      %p148 = scmp.ne.s32.totalorder %s143, %s145
      %p149 = scmp.eq.s32.totalorder %s20, 0
      %p150 = por %p148, %p149
      %p151 = scmp.ne.s32.totalorder %s143, %s145
      %p152 = scmp.eq.s32.totalorder %s25, 1
      %p153 = por %p151, %p152
      %p154 = scmp.ne.s32.totalorder %s145, %s146
      %p155 = scmp.eq.s32.totalorder %s25, 0
      %p156 = por %p154, %p155
      %p157 = scmp.ne.s32.totalorder %s145, %s146
      %p158 = scmp.eq.s32.totalorder %s26, 1
      %p159 = por %p157, %p158
      %p161 = scmp.ne.s32.totalorder %s146, %s160
      %p162 = scmp.eq.s32.totalorder %s26, 0
      %p163 = por %p161, %p162
      %s164 = ssub.s32 %s20, %s27
      %p165 = scmp.eq.s32.totalorder %s164, 0
      %s167 = sadd.s32 %s166, 1
      %s168 = scalar_select %p165, %s166, %s167
      %p171 = pneg %p165
      %p172 = scmp.eq.s32.totalorder %s20, 1
      %p173 = por %p171, %p172
      %p174 = scmp.ne.s32.totalorder %s166, %s169
      %p175 = scmp.eq.s32.totalorder %s20, 0
      %p176 = por %p174, %p175
      %p177 = scmp.ne.s32.totalorder %s166, %s169
      %p178 = scmp.eq.s32.totalorder %s25, 1
      %p179 = por %p177, %p178
      %p180 = scmp.ne.s32.totalorder %s169, %s170
      %p181 = scmp.eq.s32.totalorder %s25, 0
      %p182 = por %p180, %p181
      %p183 = scmp.ne.s32.totalorder %s169, %s170
      %p184 = scmp.eq.s32.totalorder %s26, 1
      %p185 = por %p183, %p184
      %p187 = scmp.ne.s32.totalorder %s170, %s186
      %p188 = scmp.eq.s32.totalorder %s26, 0
      %p189 = por %p187, %p188
      %s190 = ssub.s32 %s20, %s27
      %p191 = scmp.eq.s32.totalorder %s190, 0
      %s193 = sadd.s32 %s192, 1
      %s194 = scalar_select %p191, %s192, %s193
      %p197 = pneg %p191
      %p198 = scmp.eq.s32.totalorder %s20, 1
      %p199 = por %p197, %p198
      %p200 = scmp.ne.s32.totalorder %s192, %s195
      %p201 = scmp.eq.s32.totalorder %s20, 0
      %p202 = por %p200, %p201
      %p203 = scmp.ne.s32.totalorder %s192, %s195
      %p204 = scmp.eq.s32.totalorder %s25, 1
      %p205 = por %p203, %p204
      %p206 = scmp.ne.s32.totalorder %s195, %s196
      %p207 = scmp.eq.s32.totalorder %s25, 0
      %p208 = por %p206, %p207
      %p209 = scmp.ne.s32.totalorder %s195, %s196
      %p210 = scmp.eq.s32.totalorder %s26, 1
      %p211 = por %p209, %p210
      %p213 = scmp.ne.s32.totalorder %s196, %s212
      %p214 = scmp.eq.s32.totalorder %s26, 0
      %p215 = por %p213, %p214
      %p216 = scmp.le.s32.totalorder 1, %s20
      %p217 = scmp.lt.s32.totalorder %s20, 3
      %p218 = pnand %p216, %p217
      %p219 = pneg %p218
      // Predicated region
      $region9: #{symmetric_contrast_block.1} parent=5 // pred_check
        _
      $region10: #{symmetric_contrast_block.1} parent=5 // pred_check_branch
        %221 = sbr.rel (%p218) target = $region12
      $region11: #{symmetric_contrast_block.1} parent=5 // pred_region
        %s222 = ssub.s32 %s20, 1
        // Predicated region
        $region13: #{symmetric_contrast_block.1} parent=11 // pred_check
          %p223 = pneg %p93
        $region14: #{symmetric_contrast_block.1} parent=11 // pred_check_branch
          %225 = sbr.rel (%p223) target = $region16
        $region15: #{symmetric_contrast_block.1} parent=11 // pred_region
          _
        $region16: #{symmetric_contrast_block.1} parent=11 // pred_fallthru
          _
        // Predicated region
        $region17: #{symmetric_contrast_block.1} parent=11 // pred_check
          %p226 = pneg %p114
        $region18: #{symmetric_contrast_block.1} parent=11 // pred_check_branch
          %228 = sbr.rel (%p226) target = $region20
        $region19: #{symmetric_contrast_block.1} parent=11 // pred_region
          _
        $region20: #{symmetric_contrast_block.1} parent=11 // pred_fallthru
          _
        // Predicated region
        $region21: #{symmetric_contrast_block.1} parent=11 // pred_check
          %p229 = pneg %p135
        $region22: #{symmetric_contrast_block.1} parent=11 // pred_check_branch
          %231 = sbr.rel (%p229) target = $region24
        $region23: #{symmetric_contrast_block.1} parent=11 // pred_region
          _
        $region24: #{symmetric_contrast_block.1} parent=11 // pred_fallthru
          _
        // Predicated region
        $region25: #{symmetric_contrast_block.1} parent=11 // pred_check
          %p232 = pneg %p156
        $region26: #{symmetric_contrast_block.1} parent=11 // pred_check_branch
          %234 = sbr.rel (%p232) target = $region28
        $region27: #{symmetric_contrast_block.1} parent=11 // pred_region
          _
        $region28: #{symmetric_contrast_block.1} parent=11 // pred_fallthru
          _
      $region12: #{symmetric_contrast_block.1} parent=5 // pred_fallthru
        _
      %p235 = scmp.lt.s32.totalorder %s20, 2
      // Predicated region
      $region29: #{symmetric_contrast_block.1} parent=5 // pred_check
        %p236 = pneg %p235
      $region30: #{symmetric_contrast_block.1} parent=5 // pred_check_branch
        %238 = sbr.rel (%p236) target = $region32
      $region31: #{symmetric_contrast_block.1} parent=5 // pred_region
        // Predicated region
        $region33: #{symmetric_contrast_block.1} parent=31 // pred_check
          %p239 = pneg %p40
        $region34: #{symmetric_contrast_block.1} parent=31 // pred_check_branch
          %241 = sbr.rel (%p239) target = $region36
        $region35: #{symmetric_contrast_block.1} parent=31 // pred_region
          %p242 = scmp.lt.s32.totalorder %s20, 1
          %s243 = scalar_select %p242, %s20, 1
          %s244 = smul.addr %s243, 8
          %s245 = scalar_lea.vmem %s0, %s244
        $region36: #{symmetric_contrast_block.1} parent=31 // pred_fallthru
          _
        // Predicated region
        $region37: #{symmetric_contrast_block.1} parent=31 // pred_check
          %p246 = pneg %p66
        $region38: #{symmetric_contrast_block.1} parent=31 // pred_check_branch
          %248 = sbr.rel (%p246) target = $region40
        $region39: #{symmetric_contrast_block.1} parent=31 // pred_region
          %p249 = scmp.lt.s32.totalorder %s20, 1
          %s250 = scalar_select %p249, %s20, 1
          %s251 = smul.addr %s250, 8
          %s252 = scalar_lea.vmem %s1, %s251
        $region40: #{symmetric_contrast_block.1} parent=31 // pred_fallthru
          _
      $region32: #{symmetric_contrast_block.1} parent=5 // pred_fallthru
        _
      %p253 = scmp.le.s32.totalorder 1, %s20
      %p254 = scmp.lt.s32.totalorder %s20, 3
      %p255 = pnand %p253, %p254
      %p256 = pneg %p255
      // Predicated region
      $region41: #{symmetric_contrast_block.1} parent=5 // pred_check
        _
      $region42: #{symmetric_contrast_block.1} parent=5 // pred_check_branch
        %258 = sbr.rel (%p255) target = $region44
      $region43: #{symmetric_contrast_block.1} parent=5 // pred_region
        %s259 = ssub.s32 %s20, 1
        %p260 = scmp.lt.s32.totalorder %s25, 1
        %s261 = scalar_select %p260, %s25, 1
        %s262 = smul.addr %s261, 8
        %s263 = scalar_lea.vmem %s0, %s262
        %p264 = pneg %p46
        %p265 = pneg %p43
        %p266 = scmp.lt.s32.totalorder %s25, 1
        %s267 = scalar_select %p266, %s25, 1
        %s268 = smul.addr %s267, 8
        %s269 = scalar_lea.vmem %s1, %s268
        %p270 = pneg %p72
        %p271 = pneg %p69
        %p272 = pneg %p93
        %p273 = pneg %p90
        %p274 = pneg %p114
        %p275 = pneg %p111
        %p276 = pneg %p135
        %p277 = pneg %p132
        %p278 = pneg %p156
        %p279 = pneg %p153
        %p280 = pneg %p182
        %p281 = pneg %p179
        %s282 = sand.u32 %s169, 1
        %s283 = scalar_lea.sflag [#allocation3], %s282
        %s284 = sand.u32 %s169, 1
        %s285 = smul.addr %s284, 8
        %s286 = scalar_lea.vmem [#allocation2], %s285
        %p287 = pneg %p208
        %p288 = pneg %p205
        %s289 = sand.u32 %s195, 1
        %s290 = scalar_lea.sflag [#allocation5], %s289
        %s291 = sand.u32 %s195, 1
        %s292 = smul.addr %s291, 8
        %s293 = scalar_lea.vmem [#allocation4], %s292
        %p294 = scmp.lt.s32.totalorder %s25, 1
        %s295 = scalar_select %p294, %s25, 1
        %s296 = smul.addr %s295, 8
        %s297 = scalar_lea.vmem %s0, %s296
        %p298 = scmp.lt.s32.totalorder %s25, 1
        %s299 = scalar_select %p298, %s25, 1
        %s300 = smul.addr %s299, 8
        %s301 = scalar_lea.vmem %s1, %s300
        %v303 = vld [vmem:[%s297] sm:$0xff]
        %v304 = vld [vmem:[%s301] sm:$0xff]
        %v305 = vld [vmem:[%s2] sm:$0xf]
        %v306 = vld [vmem:[%s2 + $0x4] sm:$0xf]
        %v307 = vld [vmem:[%s2 + $0x8] sm:$0xf]
        %v308 = vld [vmem:[%s2 + $0xc] sm:$0xf]
        %v309 = vld [vmem:[%s4] sm:$0xf]
        %v310 = vld [vmem:[%s4 + $0x4] sm:$0xf]
        %v311 = vld [vmem:[%s4 + $0x8] sm:$0xf]
        %v312 = vld [vmem:[%s4 + $0xc] sm:$0xf]
        %v313 = vld [vmem:[%s3] sm:$0x1]
        %v314 = vld [vmem:[%s5] sm:$0x1]
        %v315 = vpack.c.bf16 %v304, %v303
        %v317 = vlaneseq
        %v318 = vshrl.u32 %v317, 7
        %v319 = vsub.s32 0, %v318
        %v320 = vrot.slane %v313, %v319
        %v326 = vunpack.c.l.b16 %v305
        %v327 = vunpack.c.l.b16 %v306
        %v328 = vunpack.c.l.b16 %v307
        %v329 = vunpack.c.l.b16 %v308
        %v330 = vpack.c.b16 %v327, %v326
        %v331 = vpack.c.b16 %v329, %v328
        %vm334 = vcmask 261120
        %v336 = vsel %vm334, %v315, 0
        %338 = vmatprep.subr.bf16.mxu0 0
        %339 = vmatpush1.bf16.msra.mxu0 0
        %340 = vmatprep.subr.bf16.mxu0 0
        %341 = vmatpush1.bf16.msra.mxu0 0
        %342 = vmatprep.subr.bf16.mxu0 0
        %343 = vmatpush1.bf16.msra.mxu0 0
        %344 = vmatprep.subr.bf16.mxu0 0
        %345 = vmatpush1.bf16.msra.mxu0 0
        %346 = vmatprep.subr.bf16.mxu0 0
        %347 = vmatpush1.bf16.msra.mxu0 0
        %348 = vmatprep.subr.bf16.mxu0 0
        %349 = vmatpush1.bf16.msra.mxu0 0
        %350 = vmatprep.subr.bf16.mxu0 0
        %351 = vmatpush1.bf16.msra.mxu0 %v331
        %352 = vmatprep.subr.bf16.mxu0 0
        %353 = vmatpush1.bf16.msra.mxu0 %v330
        %354 = vmatprep.subr.bf16.mxu0 0
        %355 = vmatpush2.bf16.msra.mxu0 0
        %356 = vmatprep.subr.bf16.mxu0 0
        %357 = vmatpush2.bf16.msra.mxu0 0
        %358 = vmatprep.subr.bf16.mxu0 0
        %359 = vmatpush2.bf16.msra.mxu0 0
        %360 = vmatprep.subr.bf16.mxu0 0
        %361 = vmatpush2.bf16.msra.mxu0 0
        %362 = vmatprep.subr.bf16.mxu0 0
        %363 = vmatpush2.bf16.msra.mxu0 0
        %364 = vmatprep.subr.bf16.mxu0 0
        %365 = vmatpush2.bf16.msra.mxu0 0
        %366 = vmatprep.subr.bf16.mxu0 0
        %367 = vmatpush2.bf16.msra.mxu0 0
        %368 = vmatprep.subr.bf16.mxu0 0
        %369 = vmatpush2.bf16.msra.mxu0 0
        %370 = vmatprep.mubr.bf16.mxu0 0
        %371 = vmatmul.mubr.bf16.gmra.mxu0 %v336
        %v372 = vpop.f32.mrf.mxu0
        %v373 = vadd.f32 %v320, %v372
        %v374 = vpop.f32.mrf.mxu0
        %v375 = vpop.f32.mrf.mxu0
        %v376 = vadd.f32 %v320, %v375
        %v377 = vpop.f32.mrf.mxu0
        %378 = vdwg.mxu0
        %v379 = vmax.f32 %v373, 0.0
        %v380 = vmax.f32 %v376, 0.0
        %v381 = vpack.c.bf16 %v380, %v379
        %v383 = vlaneseq
        %v384 = vshrl.u32 %v383, 7
        %v385 = vsub.s32 0, %v384
        %v386 = vrot.slane %v314, %v385
        %v392 = vunpack.c.l.b16 %v309
        %v393 = vunpack.c.l.b16 %v310
        %v394 = vunpack.c.l.b16 %v311
        %v395 = vunpack.c.l.b16 %v312
        %v396 = vpack.c.b16 %v393, %v392
        %v397 = vpack.c.b16 %v395, %v394
        %v401 = vsel %vm334, %v381, 0
        %403 = vmatprep.subr.bf16.mxu0 0
        %404 = vmatpush1.bf16.msra.mxu0 0
        %405 = vmatprep.subr.bf16.mxu0 0
        %406 = vmatpush1.bf16.msra.mxu0 0
        %407 = vmatprep.subr.bf16.mxu0 0
        %408 = vmatpush1.bf16.msra.mxu0 0
        %409 = vmatprep.subr.bf16.mxu0 0
        %410 = vmatpush1.bf16.msra.mxu0 0
        %411 = vmatprep.subr.bf16.mxu0 0
        %412 = vmatpush1.bf16.msra.mxu0 0
        %413 = vmatprep.subr.bf16.mxu0 0
        %414 = vmatpush1.bf16.msra.mxu0 0
        %415 = vmatprep.subr.bf16.mxu0 0
        %416 = vmatpush1.bf16.msra.mxu0 %v397
        %417 = vmatprep.subr.bf16.mxu0 0
        %418 = vmatpush1.bf16.msra.mxu0 %v396
        %419 = vmatprep.subr.bf16.mxu0 0
        %420 = vmatpush2.bf16.msra.mxu0 0
        %421 = vmatprep.subr.bf16.mxu0 0
        %422 = vmatpush2.bf16.msra.mxu0 0
        %423 = vmatprep.subr.bf16.mxu0 0
        %424 = vmatpush2.bf16.msra.mxu0 0
        %425 = vmatprep.subr.bf16.mxu0 0
        %426 = vmatpush2.bf16.msra.mxu0 0
        %427 = vmatprep.subr.bf16.mxu0 0
        %428 = vmatpush2.bf16.msra.mxu0 0
        %429 = vmatprep.subr.bf16.mxu0 0
        %430 = vmatpush2.bf16.msra.mxu0 0
        %431 = vmatprep.subr.bf16.mxu0 0
        %432 = vmatpush2.bf16.msra.mxu0 0
        %433 = vmatprep.subr.bf16.mxu0 0
        %434 = vmatpush2.bf16.msra.mxu0 0
        %435 = vmatprep.mubr.bf16.mxu0 0
        %436 = vmatmul.mubr.bf16.gmra.mxu0 %v401
        %v437 = vpop.f32.mrf.mxu0
        %v438 = vadd.f32 %v386, %v437
        %v439 = vpop.f32.mrf.mxu0
        %v440 = vpop.f32.mrf.mxu0
        %v441 = vadd.f32 %v386, %v440
        %v442 = vpop.f32.mrf.mxu0
        %443 = vdwg.mxu0
        %v444 = vsub.f32 %v303, %v441
        %445 = vst.msk [vmem:[%s286] sm:$0xff] %vm334, %v444
        %v446 = vsub.f32 %v304, %v438
        %447 = vst.msk [vmem:[%s293] sm:$0xff] %vm334, %v446
        %s448 = sand.u32 %s169, 1
        %s449 = scalar_lea.sflag [#allocation3], %s448
        %s450 = sand.u32 %s169, 1
        %s451 = smul.addr %s450, 8
        %s452 = scalar_lea.vmem [#allocation2], %s451
        %s453 = sand.u32 %s195, 1
        %s454 = scalar_lea.sflag [#allocation5], %s453
        %s455 = sand.u32 %s195, 1
        %s456 = smul.addr %s455, 8
        %s457 = scalar_lea.vmem [#allocation4], %s456
        // Predicated region
        $region45: #{symmetric_contrast_block.1} parent=43 // pred_check
          %p458 = pneg %p179
        $region46: #{symmetric_contrast_block.1} parent=43 // pred_check_branch
          %460 = sbr.rel (%p458) target = $region48
        $region47: #{symmetric_contrast_block.1} parent=43 // pred_region
          %s462 = ssub.s32 128, 128
          %463 = vsyncadd %s449, %s462
          %s464 = smul.addr %s25, 128
          %s465 = scalar_lea.hbm %s6, %s464
          %s467 = sshll.u32 %s452, 4
          %s468 = int_to_ptr.vmem [resolvable:$true] %s467
          %470 = dma.vmem_to_hbm [thread:$0]  %s468, 128, %s465, %s449
        $region48: #{symmetric_contrast_block.1} parent=43 // pred_fallthru
          _
        // Predicated region
        $region49: #{symmetric_contrast_block.1} parent=43 // pred_check
          %p471 = pneg %p205
        $region50: #{symmetric_contrast_block.1} parent=43 // pred_check_branch
          %473 = sbr.rel (%p471) target = $region52
        $region51: #{symmetric_contrast_block.1} parent=43 // pred_region
          %s475 = ssub.s32 128, 128
          %476 = vsyncadd %s454, %s475
          %s477 = smul.addr %s25, 128
          %s478 = scalar_lea.hbm %s7, %s477
          %s480 = sshll.u32 %s457, 4
          %s481 = int_to_ptr.vmem [resolvable:$true] %s480
          %483 = dma.vmem_to_hbm [thread:$0]  %s481, 128, %s478, %s454
        $region52: #{symmetric_contrast_block.1} parent=43 // pred_fallthru
          _
      $region44: #{symmetric_contrast_block.1} parent=5 // pred_fallthru
        _
      %p484 = scmp.le.s32.totalorder 2, %s20
      // Predicated region
      $region53: #{symmetric_contrast_block.1} parent=5 // pred_check
        %p485 = pneg %p484
      $region54: #{symmetric_contrast_block.1} parent=5 // pred_check_branch
        %487 = sbr.rel (%p485) target = $region56
      $region55: #{symmetric_contrast_block.1} parent=5 // pred_region
        %s488 = ssub.s32 %s20, 2
        // Predicated region
        $region57: #{symmetric_contrast_block.1} parent=55 // pred_check
          %p489 = pneg %p185
        $region58: #{symmetric_contrast_block.1} parent=55 // pred_check_branch
          %491 = sbr.rel (%p489) target = $region60
        $region59: #{symmetric_contrast_block.1} parent=55 // pred_region
          %s492 = sand.u32 %s170, 1
          %s493 = scalar_lea.sflag [#allocation3], %s492
          %s494 = sand.u32 %s170, 1
          %s495 = smul.addr %s494, 8
          %s496 = scalar_lea.vmem [#allocation2], %s495
          %497 = dma.done %s493, 128
        $region60: #{symmetric_contrast_block.1} parent=55 // pred_fallthru
          _
        // Predicated region
        $region61: #{symmetric_contrast_block.1} parent=55 // pred_check
          %p498 = pneg %p211
        $region62: #{symmetric_contrast_block.1} parent=55 // pred_check_branch
          %500 = sbr.rel (%p498) target = $region64
        $region63: #{symmetric_contrast_block.1} parent=55 // pred_region
          %s501 = sand.u32 %s196, 1
          %s502 = scalar_lea.sflag [#allocation5], %s501
          %s503 = sand.u32 %s196, 1
          %s504 = smul.addr %s503, 8
          %s505 = scalar_lea.vmem [#allocation4], %s504
          %506 = dma.done %s502, 128
        $region64: #{symmetric_contrast_block.1} parent=55 // pred_fallthru
          _
      $region56: #{symmetric_contrast_block.1} parent=5 // pred_fallthru
        _
    $region6: #{symmetric_contrast_block.1} parent=1 // loop_footer
      %s24 = sadd.s32 1, %s20
    $region7: #{symmetric_contrast_block.1} parent=1 // loop_footer_branch
      %19 = sbr.rel target = $region3
    $region8: #{symmetric_contrast_block.1} parent=1 // loop_exit
      _
    %507 = vsyncpa [#allocation3], 1
    %s508 = scalar_lea.sflag [#allocation3], 1
    %509 = vsyncpa %s508, 1
    %510 = vsyncpa [#allocation5], 1
    %s511 = scalar_lea.sflag [#allocation5], 1
    %512 = vsyncpa %s511, 1

</llo_original>
